<compile_context>
chip_gen: v7x
topology: tpu7x:2x2x1
jax: 0.10.0
libtpu: 0.0.40
codegen_flags: <defaults>
</compile_context>

<pallas_src>
import jax
import jax.numpy as jnp
from jax.experimental import pallas as pl
from jax.experimental.pallas import tpu as pltpu

_P = 0.5                      # dropout probability (F.dropout default)
_KEEP = 1.0 - _P
# keep an element  <=>  uniform u32 < _KEEP * 2^32   (exactly 2^31 for p=0.5)
_KEEP_THRESHOLD_U32 = int(round(_KEEP * float(2 ** 32)))

_TILE_ELEMS = 1024 * 1024     # ~4 MiB per f32 tile (review: >= (1024,1024))
_SINGLE_BLOCK_MAX = 64 * 1024 # max elems handled as one (1, n) block
_VMEM_LIMIT = 32 << 20        # explicit scoped-VMEM limit (v5e default is 16 MiB)


def _dropout_prng_kernel(seed_ref, x_ref, o_ref):
    """TPU path: hardware PRNG inside the kernel, per-call + per-tile stream."""
    # prng_seed hashes its arguments together, so (seed, tile) pairs from
    # different calls with nearby base seeds do not reuse each other's streams.
    pltpu.prng_seed(seed_ref[0], pl.program_id(0))
    bits = pltpu.prng_random_bits(x_ref.shape)
    if bits.dtype != jnp.uint32:
        bits = pltpu.bitcast(bits, jnp.uint32)
    keep = bits < jnp.uint32(_KEEP_THRESHOLD_U32)
    x = x_ref[...]
    scale = jnp.asarray(1.0 / _KEEP, dtype=x.dtype)   # stay in input dtype
    o_ref[...] = jnp.where(keep, x * scale, jnp.zeros_like(x))


def _dropout_mask_kernel(x_ref, u_ref, o_ref):
    """Portable path (non-TPU backends): uniforms supplied as a second input."""
    keep = u_ref[...] >= jnp.float32(_P)
    x = x_ref[...]
    scale = jnp.asarray(1.0 / _KEEP, dtype=x.dtype)
    o_ref[...] = jnp.where(keep, x * scale, jnp.zeros_like(x))


def _pick_lane(n):
    """Largest lane-dense width (multiple of 128) that divides n exactly."""
    for lane in (1024, 512, 256, 128):
        if n % lane == 0:
            return lane
    return None


def _dropout_impl(x, key):
    """Dropout(p=0.5, training=True) implemented as a Pallas kernel."""
    if x.size == 0:
        return x
    orig_shape = x.shape
    n = x.size
    itemsize = jnp.dtype(x.dtype).itemsize
    flat = x.reshape(-1)            # free (bitcast) under jit for contiguous x

    lane = _pick_lane(n)
    pad = 0
    if lane is None:
        if n <= _SINGLE_BLOCK_MAX:
            # Small ragged input: one full-extent (1, n) block, no padding.
            slab = flat.reshape(1, n)
            tile_m, tile_n = 1, n
        else:
            # TODO(synk): rare fallback — large input whose size is not a
            # multiple of 128; pad once to a lane-dense width (extra HBM copy).
            lane = 1024
            pad = (-n) % lane
            flat = jnp.pad(flat, (0, pad))
    if lane is not None:
        m = flat.shape[0] // lane
        slab = flat.reshape(m, lane)
        # ~4 MiB (f32) row tile, multiple of 8; full extent if the slab is small.
        t = max(8, ((_TILE_ELEMS // lane) // 8) * 8)
        tile_m = m if m <= t else t
        tile_n = lane

    m = slab.shape[0]
    grid = (pl.cdiv(m, tile_m),)    # ragged last block is masked by Pallas
    block = pl.BlockSpec((tile_m, tile_n), lambda i: (i, 0))
    out_shape = jax.ShapeDtypeStruct(slab.shape, x.dtype)
    cost = pl.CostEstimate(flops=n, transcendentals=0,
                           bytes_accessed=2 * n * itemsize)

    if jax.default_backend() == "tpu":
        # Fresh scalar base seed per call; kernel mixes in pl.program_id(0).
        seed = jax.random.randint(key, (1,), 0, 2 ** 31 - 1, dtype=jnp.int32)
        out = pl.pallas_call(
            _dropout_prng_kernel,
            out_shape=out_shape,
            grid=grid,
            in_specs=[
                pl.BlockSpec(memory_space=pltpu.MemorySpace.SMEM),  # seed
                block,                                              # data
            ],
            out_specs=block,
            compiler_params=pltpu.CompilerParams(
                dimension_semantics=("parallel",),
                vmem_limit_bytes=_VMEM_LIMIT),
            cost_estimate=cost,
        )(seed, slab)
    else:
        # TODO(synk): pltpu.prng_seed/prng_random_bits have no lowering off-TPU;
        # feed host-generated uniforms so the kernel still runs under interpret.
        u = jax.random.uniform(key, slab.shape, dtype=jnp.float32)
        out = pl.pallas_call(
            _dropout_mask_kernel,
            out_shape=out_shape,
            grid=grid,
            in_specs=[block, block],
            out_specs=block,
            cost_estimate=cost,
        )(slab, u)

    out_flat = out.reshape(-1)
    if pad:
        out_flat = out_flat[:n]
    return out_flat.reshape(orig_shape)


# Jit the whole wrapper so reshapes/seed-draw fuse and launches amortize.
dropout_pallas = jax.jit(_dropout_impl)


class Model:
    """JAX/Pallas equivalent of the reference torch Model (no parameters)."""

    def __call__(self, x1, key):
        x2 = dropout_pallas(x1, key)
        tmp = x2  # mirrors the reference (unused)
        return x2


if __name__ == "__main__":
    root = jax.random.PRNGKey(0)
    k_data, k_drop1, k_drop2, k_drop3 = jax.random.split(root, 4)

    model = Model()

    # Shape from the module spec: torch.randn(1, 2, 2) -> tiny (1, n) block path.
    x1 = jax.random.normal(k_data, (1, 2, 2), dtype=jnp.float32)
    y1 = model(x1, k_drop1)
    jax.block_until_ready(y1)
    assert y1.shape == x1.shape and y1.dtype == x1.dtype
    ok1 = jnp.all(jnp.logical_or(jnp.isclose(y1, 0.0),
                                 jnp.isclose(y1, 2.0 * x1)))
    assert bool(ok1)

    # Multiple-of-1024 input: lane-dense (m, 1024) slab, no pad/slice copies.
    x2 = jax.random.normal(k_data, (2, 4, 16, 16), dtype=jnp.float32)
    y2 = model(x2, k_drop2)
    jax.block_until_ready(y2)
    assert y2.shape == x2.shape and y2.dtype == x2.dtype
    ok2 = jnp.all(jnp.logical_or(jnp.isclose(y2, 0.0),
                                 jnp.isclose(y2, 2.0 * x2)))
    assert bool(ok2)

    # Multiple-of-128 (not 1024) input: (m, 128) slab path, still no pad.
    x3 = jax.random.normal(k_data, (2, 4, 16, 17), dtype=jnp.float32)
    y3 = model(x3, k_drop3)
    jax.block_until_ready(y3)
    assert y3.shape == x3.shape and y3.dtype == x3.dtype
    ok3 = jnp.all(jnp.logical_or(jnp.isclose(y3, 0.0),
                                 jnp.isclose(y3, 2.0 * x3)))
    assert bool(ok3)

    print("KERNEL_OK")
</pallas_src>

<mosaic_0001>
module attributes {stable_mosaic.version = 11 : i64} {
  func.func @_dropout_mask_kernel(%arg0: i32, %arg1: memref<1x4xf32, #tpu.memory_space<vmem>>, %arg2: memref<1x4xf32, #tpu.memory_space<vmem>>, %arg3: memref<1x4xf32, #tpu.memory_space<vmem>>) attributes {dimension_semantics = [#tpu.dimension_semantics<arbitrary>], iteration_bounds = array<i64: 1>, scalar_prefetch = 0 : i64, scratch_operands = 0 : i64, tpu.core_type = #tpu.core_type<tc>, window_params = [{transform_indices = @transform_0, window_bounds = array<i64: 1, 4>}, {transform_indices = @transform_1, window_bounds = array<i64: 1, 4>}, {transform_indices = @transform_2, window_bounds = array<i64: 1, 4>}]} {
    %c0 = arith.constant 0 : index
    %c0_0 = arith.constant 0 : index
    %0 = vector.load %arg2[%c0, %c0_0] : memref<1x4xf32, #tpu.memory_space<vmem>>, vector<1x4xf32>
    %cst = arith.constant 5.000000e-01 : f32
    %1 = vector.broadcast %cst : f32 to vector<1x4xf32>
    %2 = arith.cmpf oge, %0, %1 : vector<1x4xf32>
    %c0_1 = arith.constant 0 : index
    %c0_2 = arith.constant 0 : index
    %3 = vector.load %arg1[%c0_1, %c0_2] : memref<1x4xf32, #tpu.memory_space<vmem>>, vector<1x4xf32>
    %cst_3 = arith.constant 2.000000e+00 : f32
    %4 = vector.broadcast %cst_3 : f32 to vector<1x4xf32>
    %5 = arith.mulf %3, %4 : vector<1x4xf32>
    %cst_4 = arith.constant 0.000000e+00 : f32
    %6 = vector.broadcast %cst_4 : f32 to vector<1x4xf32>
    %7 = arith.select %2, %5, %6 : vector<1x4xi1>, vector<1x4xf32>
    %c0_5 = arith.constant 0 : index
    %c0_6 = arith.constant 0 : index
    %8 = vector.load %arg3[%c0_5, %c0_6] : memref<1x4xf32, #tpu.memory_space<vmem>>, vector<1x4xf32>
    tpu.vector_store %arg3[%c0_5, %c0_6], %7 {strides = array<i32>} : memref<1x4xf32, #tpu.memory_space<vmem>>, vector<1x4xf32>,
    return
  }
  func.func @transform_0(%arg0: i32) -> (i32, i32) {
    %c0_i32 = arith.constant 0 : i32
    %c0_i32_0 = arith.constant 0 : i32
    return %arg0, %c0_i32 : i32, i32
  }
  func.func @transform_1(%arg0: i32) -> (i32, i32) {
    %c0_i32 = arith.constant 0 : i32
    %c0_i32_0 = arith.constant 0 : i32
    return %arg0, %c0_i32 : i32, i32
  }
  func.func @transform_2(%arg0: i32) -> (i32, i32) {
    %c0_i32 = arith.constant 0 : i32
    %c0_i32_0 = arith.constant 0 : i32
    return %arg0, %c0_i32 : i32, i32
  }
}

</mosaic_0001>

<llo_original>
// kernel: _dropout_impl.1
$region0: #{_dropout_impl.1}
  #allocation0 [shape = 'u32[]', space=smem, size = 0x4, offset = 0x4, fixed_abs, tag = 'smem constant byte address 0x4 - core index']
  #allocation1 [shape = 'u32[144,128]{1,0:T(1,128)}', space=vmem, size = 0x12000, scoped, tag = 'internal scratch']
  %s0 = inlined_call_operand.vmem [shape: f32[1,4], index: 0, kind: input, shape index: {}]
  %s1 = inlined_call_operand.vmem [shape: f32[1,4], index: 1, kind: input, shape index: {}]
  %s2 = inlined_call_operand.vmem [shape: f32[1,4], index: 2, kind: output, shape index: {}]
  %s3 = sld [smem:[#allocation0]]
  $region18: #{_dropout_impl.1} parent=0
    _
  %s5 = ssub.s32 1, %s3
  %s6 = scalar_select 0, %s5, %s3
  // Predicated region
  $region2: #{_dropout_impl.1} parent=0 // pred_check
    _
  $region3: #{_dropout_impl.1} parent=0 // pred_check_branch
    %8 = sbr.rel (0) target = $region5
  $region4: #{_dropout_impl.1} parent=0 // pred_region
    _
  $region5: #{_dropout_impl.1} parent=0 // pred_fallthru
    _
  // Predicated region
  $region6: #{_dropout_impl.1} parent=0 // pred_check
    _
  $region7: #{_dropout_impl.1} parent=0 // pred_check_branch
    %10 = sbr.rel (0) target = $region9
  $region8: #{_dropout_impl.1} parent=0 // pred_region
    _
  $region9: #{_dropout_impl.1} parent=0 // pred_fallthru
    _
  %v11 = vld [vmem:[%s1] sm:$0x1]
  %vm12 = vcmp.ge.f32.partialorder %v11, 0.5
  %v13 = vld [vmem:[%s0] sm:$0x1]
  %v14 = vmul.f32 %v13, 2.0
  %v15 = vsel %vm12, %v14, 0.0
  %vm16 = vcmask 24576
  %17 = vst.msk [vmem:[%s2] sm:$0x1] %vm16, %v15
  // Predicated region
  $region10: #{_dropout_impl.1} parent=0 // pred_check
    _
  $region11: #{_dropout_impl.1} parent=0 // pred_check_branch
    %19 = sbr.rel (0) target = $region13
  $region12: #{_dropout_impl.1} parent=0 // pred_region
    _
  $region13: #{_dropout_impl.1} parent=0 // pred_fallthru
    _
  // Predicated region
  $region14: #{_dropout_impl.1} parent=0 // pred_check
    _
  $region15: #{_dropout_impl.1} parent=0 // pred_check_branch
    %21 = sbr.rel (0) target = $region17
  $region16: #{_dropout_impl.1} parent=0 // pred_region
    _
  $region17: #{_dropout_impl.1} parent=0 // pred_fallthru
    _

</llo_original>
